<compile_context>
chip_gen: v6e
topology: v6e:2x2x1
jax: 0.10.0
libtpu: 0.0.40
codegen_flags: <defaults>
</compile_context>

<pallas_src>
import functools
import math

import jax
import jax.numpy as jnp
from jax.experimental import pallas as pl
from jax.experimental.pallas import tpu as pltpu


def _cross_modal_attn_kernel(x_ref, wqkv_ref, bqkv_ref, wo_ref, gbb_ref, o_ref,
                             *, batch, num_heads, head_dim, eps):
    N, H, hd = batch, num_heads, head_dim
    E = H * hd
    x = x_ref[...]                        # [L*N, E], rows ordered (modality l, batch n)
    LN = x.shape[0]

    # ---- fused QKV projection: ONE lane-dense MXU matmul [LN,E] @ [E,3E] ----
    # (1/sqrt(hd) scale is pre-folded into the Q columns / Q bias.)
    qkv = jnp.dot(x, wqkv_ref[...], preferred_element_type=jnp.float32) + bqkv_ref[...]

    # ---- batch-separation mask ----------------------------------------------
    # Rows/cols are (l, n) ordered; keys belonging to a different batch index n
    # are masked out, so both batch elements share the same 2-D score matmul.
    r = jax.lax.broadcasted_iota(jnp.int32, (LN, LN), 0)
    c = jax.lax.broadcasted_iota(jnp.int32, (LN, LN), 1)
    neg = jnp.where((r % N) == (c % N), 0.0, -1e30).astype(jnp.float32)

    # ---- attention: short unrolled loop over heads (all 2-D ops) -------------
    ctx_heads = []
    for h in range(H):
        qh = qkv[:, h * hd:(h + 1) * hd]                      # [LN, hd] (pre-scaled)
        kh = qkv[:, E + h * hd:E + (h + 1) * hd]              # [LN, hd]
        vh = qkv[:, 2 * E + h * hd:2 * E + (h + 1) * hd]      # [LN, hd]
        s = jnp.dot(qh, kh.T, preferred_element_type=jnp.float32) + neg   # [LN, LN]
        s = s - jnp.max(s, axis=-1, keepdims=True)            # stable softmax
        p = jnp.exp(s)
        p = p * pl.reciprocal(jnp.sum(p, axis=-1, keepdims=True), approx=False)
        # TODO(synk): attention dropout omitted (eval-mode identity).
        ctx_heads.append(jnp.dot(p, vh, preferred_element_type=jnp.float32))  # [LN, hd]

    # ---- lane-concat heads + ONE output-projection matmul [LN,E] @ [E,E] ----
    ctx = jnp.concatenate(ctx_heads, axis=-1)                 # [LN, E]
    proj = jnp.dot(ctx, wo_ref[...], preferred_element_type=jnp.float32) + gbb_ref[2:3, :]

    # ---- residual + LayerNorm (output dropout is identity in eval mode) -----
    y = x + proj
    mean = jnp.mean(y, axis=-1, keepdims=True)
    var = jnp.mean(jnp.square(y - mean), axis=-1, keepdims=True)
    yn = (y - mean) * jax.lax.rsqrt(var + eps)
    o_ref[...] = yn * gbb_ref[0:1, :] + gbb_ref[1:2, :]


def fuse_params(params, num_heads):
    """One-time weight fusion (hoisted out of the jitted per-call path).

    Returns:
      wqkv : [E, 3E]   pre-transposed [Wq^T*scale | Wk^T | Wv^T]
      bqkv : [1, 3E]   [bq*scale | bk | bv]
      wo_t : [E, E]    Wo^T
      gbb  : [3, E]    rows = (gamma, beta, bo)
    """
    E = params["wq"].shape[0]
    hd = E // num_heads
    scale = 1.0 / math.sqrt(hd)
    wqkv = jnp.concatenate(
        [params["wq"].T * scale, params["wk"].T, params["wv"].T], axis=1)
    bqkv = jnp.concatenate(
        [params["bq"] * scale, params["bk"], params["bv"]], axis=1)
    wo_t = params["wo"].T
    gbb = jnp.concatenate([params["gamma"], params["beta"], params["bo"]], axis=0)
    return wqkv, bqkv, wo_t, gbb


@functools.partial(jax.jit, static_argnames=("num_heads", "eps"))
def cross_modal_attention(x, wqkv, bqkv, wo_t, gbb, *, num_heads=4, eps=1e-5):
    """x: [num_modalities L, batch N, dim E] float32 -> same shape."""
    L, N, E = x.shape
    assert E % num_heads == 0
    head_dim = E // num_heads

    x2 = x.reshape(L * N, E)                      # contiguous reshape: rows = (l, n)
    kern = functools.partial(_cross_modal_attn_kernel, batch=N,
                             num_heads=num_heads, head_dim=head_dim, eps=eps)

    vmem = pl.BlockSpec(memory_space=pltpu.MemorySpace.VMEM)
    out = pl.pallas_call(
        kern,
        out_shape=jax.ShapeDtypeStruct((L * N, E), jnp.float32),
        in_specs=[vmem, vmem, vmem, vmem, vmem],
        out_specs=vmem,
    )(x2, wqkv, bqkv, wo_t, gbb)

    return out.reshape(L, N, E)


def init_params(key, dim):
    """Deterministic synthetic parameters matching nn.MultiheadAttention + LayerNorm."""
    ks = jax.random.split(key, 8)
    limit = math.sqrt(6.0 / (dim + dim))          # xavier-uniform-ish
    u = lambda k, shape: jax.random.uniform(k, shape, jnp.float32, -limit, limit)
    return {
        "wq": u(ks[0], (dim, dim)),
        "wk": u(ks[1], (dim, dim)),
        "wv": u(ks[2], (dim, dim)),
        "bq": u(ks[3], (1, dim)) * 0.1,
        "bk": u(ks[4], (1, dim)) * 0.1,
        "bv": u(ks[5], (1, dim)) * 0.1,
        "wo": u(ks[6], (dim, dim)),
        "bo": u(ks[7], (1, dim)) * 0.1,
        "gamma": jnp.ones((1, dim), jnp.float32),
        "beta": jnp.zeros((1, dim), jnp.float32),
    }


def _reference(x, params, num_heads, eps=1e-5):
    """Pure-JAX reference of the PyTorch forward (eval mode)."""
    L, N, E = x.shape
    hd = E // num_heads
    hp = jax.lax.Precision.HIGHEST

    def proj(t, w, b):                            # nn.Linear: t @ W.T + b
        return jnp.einsum('lne,fe->lnf', t, w, precision=hp) + b[0]

    q = proj(x, params["wq"], params["bq"])
    k = proj(x, params["wk"], params["bk"])
    v = proj(x, params["wv"], params["bv"])

    def heads(t):                                 # -> [N, H, L, hd]
        return jnp.transpose(t.reshape(L, N, num_heads, hd), (1, 2, 0, 3))

    qh, kh, vh = heads(q), heads(k), heads(v)
    s = jnp.einsum('nhld,nhmd->nhlm', qh, kh, precision=hp) / math.sqrt(hd)
    p = jax.nn.softmax(s, axis=-1)
    ctx = jnp.einsum('nhlm,nhmd->nhld', p, vh, precision=hp)
    attn = jnp.transpose(ctx, (2, 0, 1, 3)).reshape(L, N, E)
    out = proj(attn, params["wo"], params["bo"])
    y = x + out
    mean = y.mean(-1, keepdims=True)
    var = jnp.square(y - mean).mean(-1, keepdims=True)
    return (y - mean) / jnp.sqrt(var + eps) * params["gamma"][0] + params["beta"][0]


if __name__ == "__main__":
    num_modalities, batch, dim, num_heads = 6, 2, 32, 4
    key = jax.random.PRNGKey(0)
    k_x, k_p = jax.random.split(key)

    x = jax.random.normal(k_x, (num_modalities, batch, dim), jnp.float32)
    params = init_params(k_p, dim)

    # Weight fusion happens ONCE, outside the jitted forward (review item).
    fused = fuse_params(params, num_heads)

    out = cross_modal_attention(x, *fused, num_heads=num_heads)
    jax.block_until_ready(out)
    assert out.shape == (num_modalities, batch, dim)

    ref = _reference(x, params, num_heads)
    err = float(jnp.max(jnp.abs(out - ref)))
    # Exact softmax reciprocal now used; typical error is ~1e-6.  The loose
    # bound only guards against possible MXU default-precision truncation of
    # f32 matmul operands (reference uses Precision.HIGHEST).
    assert err < 2e-2, f"max abs error {err}"
    print("KERNEL_OK")
</pallas_src>

<mosaic_0001>
module attributes {stable_mosaic.version = 11 : i64} {
  func.func @_cross_modal_attn_kernel(%arg0: memref<12x32xf32, #tpu.memory_space<vmem>>, %arg1: memref<32x96xf32, #tpu.memory_space<vmem>>, %arg2: memref<1x96xf32, #tpu.memory_space<vmem>>, %arg3: memref<32x32xf32, #tpu.memory_space<vmem>>, %arg4: memref<3x32xf32, #tpu.memory_space<vmem>>, %arg5: memref<12x32xf32, #tpu.memory_space<vmem>>) attributes {dimension_semantics = [], scalar_prefetch = 0 : i64, scratch_operands = 0 : i64, tpu.core_type = #tpu.core_type<tc>} {
    %c0 = arith.constant 0 : index
    %c0_0 = arith.constant 0 : index
    %0 = vector.load %arg0[%c0, %c0_0] : memref<12x32xf32, #tpu.memory_space<vmem>>, vector<12x32xf32>
    %c0_1 = arith.constant 0 : index
    %c0_2 = arith.constant 0 : index
    %1 = vector.load %arg1[%c0_1, %c0_2] : memref<32x96xf32, #tpu.memory_space<vmem>>, vector<32x96xf32>
    %cst = arith.constant dense<0.000000e+00> : vector<12x96xf32>
    %2 = tpu.matmul %0, %1, %cst {dimension_numbers = #tpu.dot_dimension_numbers<[1], [0], [0], [1], [0, 0, 1, 1], [], []>} : vector<12x32xf32>, vector<32x96xf32>, vector<12x96xf32> -> vector<12x96xf32>
    %c0_3 = arith.constant 0 : index
    %c0_4 = arith.constant 0 : index
    %3 = vector.load %arg2[%c0_3, %c0_4] : memref<1x96xf32, #tpu.memory_space<vmem>>, vector<1x96xf32>
    %4 = vector.broadcast %3 : vector<1x96xf32> to vector<12x96xf32>
    %5 = arith.addf %2, %4 : vector<12x96xf32>
    %6 = tpu.iota {dimensions = array<i32: 0>} : vector<12x12xi32>
    %7 = tpu.iota {dimensions = array<i32: 1>} : vector<12x12xi32>
    %c2_i32 = arith.constant 2 : i32
    %c0_i32 = arith.constant 0 : i32
    %8 = arith.cmpi eq, %c2_i32, %c0_i32 : i32
    %c1_i32 = arith.constant 1 : i32
    %9 = arith.select %8, %c1_i32, %c2_i32 : i32
    %10 = vector.broadcast %9 : i32 to vector<12x12xi32>
    %11 = arith.remsi %6, %10 : vector<12x12xi32>
    %c0_i32_5 = arith.constant 0 : i32
    %12 = vector.broadcast %c0_i32_5 : i32 to vector<12x12xi32>
    %13 = arith.cmpi ne, %11, %12 : vector<12x12xi32>
    %c0_i32_6 = arith.constant 0 : i32
    %14 = vector.broadcast %c0_i32_6 : i32 to vector<12x12xi32>
    %15 = arith.cmpi slt, %11, %14 : vector<12x12xi32>
    %c0_i32_7 = arith.constant 0 : i32
    %16 = arith.cmpi slt, %9, %c0_i32_7 : i32
    %17 = vector.broadcast %16 : i1 to vector<12x12xi1>
    %18 = vector.broadcast %17 : vector<12x12xi1> to vector<12x12xi1>
    %19 = arith.xori %15, %18 : vector<12x12xi1>
    %20 = arith.andi %19, %13 : vector<12x12xi1>
    %21 = vector.broadcast %9 : i32 to vector<12x12xi32>
    %22 = arith.addi %11, %21 : vector<12x12xi32>
    %23 = arith.select %20, %22, %11 : vector<12x12xi1>, vector<12x12xi32>
    %c2_i32_8 = arith.constant 2 : i32
    %c0_i32_9 = arith.constant 0 : i32
    %24 = arith.cmpi eq, %c2_i32_8, %c0_i32_9 : i32
    %c1_i32_10 = arith.constant 1 : i32
    %25 = arith.select %24, %c1_i32_10, %c2_i32_8 : i32
    %26 = vector.broadcast %25 : i32 to vector<12x12xi32>
    %27 = arith.remsi %7, %26 : vector<12x12xi32>
    %c0_i32_11 = arith.constant 0 : i32
    %28 = vector.broadcast %c0_i32_11 : i32 to vector<12x12xi32>
    %29 = arith.cmpi ne, %27, %28 : vector<12x12xi32>
    %c0_i32_12 = arith.constant 0 : i32
    %30 = vector.broadcast %c0_i32_12 : i32 to vector<12x12xi32>
    %31 = arith.cmpi slt, %27, %30 : vector<12x12xi32>
    %c0_i32_13 = arith.constant 0 : i32
    %32 = arith.cmpi slt, %25, %c0_i32_13 : i32
    %33 = vector.broadcast %32 : i1 to vector<12x12xi1>
    %34 = vector.broadcast %33 : vector<12x12xi1> to vector<12x12xi1>
    %35 = arith.xori %31, %34 : vector<12x12xi1>
    %36 = arith.andi %35, %29 : vector<12x12xi1>
    %37 = vector.broadcast %25 : i32 to vector<12x12xi32>
    %38 = arith.addi %27, %37 : vector<12x12xi32>
    %39 = arith.select %36, %38, %27 : vector<12x12xi1>, vector<12x12xi32>
    %40 = arith.cmpi eq, %23, %39 : vector<12x12xi32>
    %cst_14 = arith.constant 0.000000e+00 : f32
    %cst_15 = arith.constant -1.000000e+30 : f32
    %41 = vector.broadcast %cst_14 : f32 to vector<12x12xf32>
    %42 = vector.broadcast %cst_15 : f32 to vector<12x12xf32>
    %43 = arith.select %40, %41, %42 : vector<12x12xi1>, vector<12x12xf32>
    %44 = vector.extract_strided_slice %5 {offsets = [0, 0], sizes = [12, 8], strides = [1, 1]} : vector<12x96xf32> to vector<12x8xf32>
    %45 = vector.extract_strided_slice %5 {offsets = [0, 32], sizes = [12, 8], strides = [1, 1]} : vector<12x96xf32> to vector<12x8xf32>
    %46 = vector.extract_strided_slice %5 {offsets = [0, 64], sizes = [12, 8], strides = [1, 1]} : vector<12x96xf32> to vector<12x8xf32>
    %47 = tpu.transpose %45, [1, 0] : vector<12x8xf32> -> vector<8x12xf32>
    %cst_16 = arith.constant dense<0.000000e+00> : vector<12x12xf32>
    %48 = tpu.matmul %44, %47, %cst_16 {dimension_numbers = #tpu.dot_dimension_numbers<[1], [0], [0], [1], [0, 0, 1, 1], [], []>} : vector<12x8xf32>, vector<8x12xf32>, vector<12x12xf32> -> vector<12x12xf32>
    %49 = arith.addf %48, %43 : vector<12x12xf32>
    %cst_17 = arith.constant dense<0xFF800000> : vector<12xf32>
    %50 = vector.multi_reduction <maximumf>, %49, %cst_17 [1] : vector<12x12xf32> to vector<12xf32>
    %51 = vector.shape_cast %50 : vector<12xf32> to vector<12x1xf32>
    %52 = vector.broadcast %51 : vector<12x1xf32> to vector<12x12xf32>
    %53 = arith.subf %49, %52 : vector<12x12xf32>
    %54 = math.exp %53 : vector<12x12xf32>
    %cst_18 = arith.constant dense<0.000000e+00> : vector<12xf32>
    %55 = vector.multi_reduction <add>, %54, %cst_18 [1] : vector<12x12xf32> to vector<12xf32>
    %56 = vector.shape_cast %55 : vector<12xf32> to vector<12x1xf32>
    %57 = tpu.reciprocal %56 : vector<12x1xf32> -> vector<12x1xf32>
    %58 = vector.broadcast %57 : vector<12x1xf32> to vector<12x12xf32>
    %59 = arith.mulf %54, %58 : vector<12x12xf32>
    %cst_19 = arith.constant dense<0.000000e+00> : vector<12x8xf32>
    %60 = tpu.matmul %59, %46, %cst_19 {dimension_numbers = #tpu.dot_dimension_numbers<[1], [0], [0], [1], [0, 0, 1, 1], [], []>} : vector<12x12xf32>, vector<12x8xf32>, vector<12x8xf32> -> vector<12x8xf32>
    %61 = vector.extract_strided_slice %5 {offsets = [0, 8], sizes = [12, 8], strides = [1, 1]} : vector<12x96xf32> to vector<12x8xf32>
    %62 = vector.extract_strided_slice %5 {offsets = [0, 40], sizes = [12, 8], strides = [1, 1]} : vector<12x96xf32> to vector<12x8xf32>
    %63 = vector.extract_strided_slice %5 {offsets = [0, 72], sizes = [12, 8], strides = [1, 1]} : vector<12x96xf32> to vector<12x8xf32>
    %64 = tpu.transpose %62, [1, 0] : vector<12x8xf32> -> vector<8x12xf32>
    %cst_20 = arith.constant dense<0.000000e+00> : vector<12x12xf32>
    %65 = tpu.matmul %61, %64, %cst_20 {dimension_numbers = #tpu.dot_dimension_numbers<[1], [0], [0], [1], [0, 0, 1, 1], [], []>} : vector<12x8xf32>, vector<8x12xf32>, vector<12x12xf32> -> vector<12x12xf32>
    %66 = arith.addf %65, %43 : vector<12x12xf32>
    %cst_21 = arith.constant dense<0xFF800000> : vector<12xf32>
    %67 = vector.multi_reduction <maximumf>, %66, %cst_21 [1] : vector<12x12xf32> to vector<12xf32>
    %68 = vector.shape_cast %67 : vector<12xf32> to vector<12x1xf32>
    %69 = vector.broadcast %68 : vector<12x1xf32> to vector<12x12xf32>
    %70 = arith.subf %66, %69 : vector<12x12xf32>
    %71 = math.exp %70 : vector<12x12xf32>
    %cst_22 = arith.constant dense<0.000000e+00> : vector<12xf32>
    %72 = vector.multi_reduction <add>, %71, %cst_22 [1] : vector<12x12xf32> to vector<12xf32>
    %73 = vector.shape_cast %72 : vector<12xf32> to vector<12x1xf32>
    %74 = tpu.reciprocal %73 : vector<12x1xf32> -> vector<12x1xf32>
    %75 = vector.broadcast %74 : vector<12x1xf32> to vector<12x12xf32>
    %76 = arith.mulf %71, %75 : vector<12x12xf32>
    %cst_23 = arith.constant dense<0.000000e+00> : vector<12x8xf32>
    %77 = tpu.matmul %76, %63, %cst_23 {dimension_numbers = #tpu.dot_dimension_numbers<[1], [0], [0], [1], [0, 0, 1, 1], [], []>} : vector<12x12xf32>, vector<12x8xf32>, vector<12x8xf32> -> vector<12x8xf32>
    %78 = vector.extract_strided_slice %5 {offsets = [0, 16], sizes = [12, 8], strides = [1, 1]} : vector<12x96xf32> to vector<12x8xf32>
    %79 = vector.extract_strided_slice %5 {offsets = [0, 48], sizes = [12, 8], strides = [1, 1]} : vector<12x96xf32> to vector<12x8xf32>
    %80 = vector.extract_strided_slice %5 {offsets = [0, 80], sizes = [12, 8], strides = [1, 1]} : vector<12x96xf32> to vector<12x8xf32>
    %81 = tpu.transpose %79, [1, 0] : vector<12x8xf32> -> vector<8x12xf32>
    %cst_24 = arith.constant dense<0.000000e+00> : vector<12x12xf32>
    %82 = tpu.matmul %78, %81, %cst_24 {dimension_numbers = #tpu.dot_dimension_numbers<[1], [0], [0], [1], [0, 0, 1, 1], [], []>} : vector<12x8xf32>, vector<8x12xf32>, vector<12x12xf32> -> vector<12x12xf32>
    %83 = arith.addf %82, %43 : vector<12x12xf32>
    %cst_25 = arith.constant dense<0xFF800000> : vector<12xf32>
    %84 = vector.multi_reduction <maximumf>, %83, %cst_25 [1] : vector<12x12xf32> to vector<12xf32>
    %85 = vector.shape_cast %84 : vector<12xf32> to vector<12x1xf32>
    %86 = vector.broadcast %85 : vector<12x1xf32> to vector<12x12xf32>
    %87 = arith.subf %83, %86 : vector<12x12xf32>
    %88 = math.exp %87 : vector<12x12xf32>
    %cst_26 = arith.constant dense<0.000000e+00> : vector<12xf32>
    %89 = vector.multi_reduction <add>, %88, %cst_26 [1] : vector<12x12xf32> to vector<12xf32>
    %90 = vector.shape_cast %89 : vector<12xf32> to vector<12x1xf32>
    %91 = tpu.reciprocal %90 : vector<12x1xf32> -> vector<12x1xf32>
    %92 = vector.broadcast %91 : vector<12x1xf32> to vector<12x12xf32>
    %93 = arith.mulf %88, %92 : vector<12x12xf32>
    %cst_27 = arith.constant dense<0.000000e+00> : vector<12x8xf32>
    %94 = tpu.matmul %93, %80, %cst_27 {dimension_numbers = #tpu.dot_dimension_numbers<[1], [0], [0], [1], [0, 0, 1, 1], [], []>} : vector<12x12xf32>, vector<12x8xf32>, vector<12x8xf32> -> vector<12x8xf32>
    %95 = vector.extract_strided_slice %5 {offsets = [0, 24], sizes = [12, 8], strides = [1, 1]} : vector<12x96xf32> to vector<12x8xf32>
    %96 = vector.extract_strided_slice %5 {offsets = [0, 56], sizes = [12, 8], strides = [1, 1]} : vector<12x96xf32> to vector<12x8xf32>
    %97 = vector.extract_strided_slice %5 {offsets = [0, 88], sizes = [12, 8], strides = [1, 1]} : vector<12x96xf32> to vector<12x8xf32>
    %98 = tpu.transpose %96, [1, 0] : vector<12x8xf32> -> vector<8x12xf32>
    %cst_28 = arith.constant dense<0.000000e+00> : vector<12x12xf32>
    %99 = tpu.matmul %95, %98, %cst_28 {dimension_numbers = #tpu.dot_dimension_numbers<[1], [0], [0], [1], [0, 0, 1, 1], [], []>} : vector<12x8xf32>, vector<8x12xf32>, vector<12x12xf32> -> vector<12x12xf32>
    %100 = arith.addf %99, %43 : vector<12x12xf32>
    %cst_29 = arith.constant dense<0xFF800000> : vector<12xf32>
    %101 = vector.multi_reduction <maximumf>, %100, %cst_29 [1] : vector<12x12xf32> to vector<12xf32>
    %102 = vector.shape_cast %101 : vector<12xf32> to vector<12x1xf32>
    %103 = vector.broadcast %102 : vector<12x1xf32> to vector<12x12xf32>
    %104 = arith.subf %100, %103 : vector<12x12xf32>
    %105 = math.exp %104 : vector<12x12xf32>
    %cst_30 = arith.constant dense<0.000000e+00> : vector<12xf32>
    %106 = vector.multi_reduction <add>, %105, %cst_30 [1] : vector<12x12xf32> to vector<12xf32>
    %107 = vector.shape_cast %106 : vector<12xf32> to vector<12x1xf32>
    %108 = tpu.reciprocal %107 : vector<12x1xf32> -> vector<12x1xf32>
    %109 = vector.broadcast %108 : vector<12x1xf32> to vector<12x12xf32>
    %110 = arith.mulf %105, %109 : vector<12x12xf32>
    %cst_31 = arith.constant dense<0.000000e+00> : vector<12x8xf32>
    %111 = tpu.matmul %110, %97, %cst_31 {dimension_numbers = #tpu.dot_dimension_numbers<[1], [0], [0], [1], [0, 0, 1, 1], [], []>} : vector<12x12xf32>, vector<12x8xf32>, vector<12x8xf32> -> vector<12x8xf32>
    %112 = tpu.concatenate %60, %77, %94, %111 in 1 : vector<12x8xf32>, vector<12x8xf32>, vector<12x8xf32>, vector<12x8xf32> -> vector<12x32xf32>
    %c0_32 = arith.constant 0 : index
    %c0_33 = arith.constant 0 : index
    %113 = vector.load %arg3[%c0_32, %c0_33] : memref<32x32xf32, #tpu.memory_space<vmem>>, vector<32x32xf32>
    %cst_34 = arith.constant dense<0.000000e+00> : vector<12x32xf32>
    %114 = tpu.matmul %112, %113, %cst_34 {dimension_numbers = #tpu.dot_dimension_numbers<[1], [0], [0], [1], [0, 0, 1, 1], [], []>} : vector<12x32xf32>, vector<32x32xf32>, vector<12x32xf32> -> vector<12x32xf32>
    %c2 = arith.constant 2 : index
    %c0_35 = arith.constant 0 : index
    %115 = vector.load %arg4[%c2, %c0_35] : memref<3x32xf32, #tpu.memory_space<vmem>>, vector<1x32xf32>
    %116 = vector.broadcast %115 : vector<1x32xf32> to vector<12x32xf32>
    %117 = arith.addf %114, %116 : vector<12x32xf32>
    %118 = arith.addf %0, %117 : vector<12x32xf32>
    %cst_36 = arith.constant dense<0.000000e+00> : vector<12xf32>
    %119 = vector.multi_reduction <add>, %118, %cst_36 [1] : vector<12x32xf32> to vector<12xf32>
    %120 = vector.shape_cast %119 : vector<12xf32> to vector<12x1xf32>
    %cst_37 = arith.constant 3.200000e+01 : f32
    %121 = vector.broadcast %cst_37 : f32 to vector<12x1xf32>
    %122 = arith.divf %120, %121 : vector<12x1xf32>
    %123 = vector.broadcast %122 : vector<12x1xf32> to vector<12x32xf32>
    %124 = arith.subf %118, %123 : vector<12x32xf32>
    %125 = arith.mulf %124, %124 : vector<12x32xf32>
    %cst_38 = arith.constant dense<0.000000e+00> : vector<12xf32>
    %126 = vector.multi_reduction <add>, %125, %cst_38 [1] : vector<12x32xf32> to vector<12xf32>
    %127 = vector.shape_cast %126 : vector<12xf32> to vector<12x1xf32>
    %cst_39 = arith.constant 3.200000e+01 : f32
    %128 = vector.broadcast %cst_39 : f32 to vector<12x1xf32>
    %129 = arith.divf %127, %128 : vector<12x1xf32>
    %130 = vector.broadcast %122 : vector<12x1xf32> to vector<12x32xf32>
    %131 = arith.subf %118, %130 : vector<12x32xf32>
    %cst_40 = arith.constant 9.99999974E-6 : f32
    %132 = vector.broadcast %cst_40 : f32 to vector<12x1xf32>
    %133 = arith.addf %129, %132 : vector<12x1xf32>
    %134 = math.rsqrt %133 : vector<12x1xf32>
    %135 = vector.broadcast %134 : vector<12x1xf32> to vector<12x32xf32>
    %136 = arith.mulf %131, %135 : vector<12x32xf32>
    %c0_41 = arith.constant 0 : index
    %c0_42 = arith.constant 0 : index
    %137 = vector.load %arg4[%c0_41, %c0_42] : memref<3x32xf32, #tpu.memory_space<vmem>>, vector<1x32xf32>
    %138 = vector.broadcast %137 : vector<1x32xf32> to vector<12x32xf32>
    %139 = arith.mulf %136, %138 : vector<12x32xf32>
    %c1 = arith.constant 1 : index
    %c0_43 = arith.constant 0 : index
    %140 = vector.load %arg4[%c1, %c0_43] : memref<3x32xf32, #tpu.memory_space<vmem>>, vector<1x32xf32>
    %141 = vector.broadcast %140 : vector<1x32xf32> to vector<12x32xf32>
    %142 = arith.addf %139, %141 : vector<12x32xf32>
    %c0_44 = arith.constant 0 : index
    %c0_45 = arith.constant 0 : index
    %143 = vector.load %arg5[%c0_44, %c0_45] : memref<12x32xf32, #tpu.memory_space<vmem>>, vector<12x32xf32>
    tpu.vector_store %arg5[%c0_44, %c0_45], %142 {strides = array<i32>} : memref<12x32xf32, #tpu.memory_space<vmem>>, vector<12x32xf32>,
    return
  }
}

</mosaic_0001>

<llo_original>
// kernel: cross_modal_attention.1
$region0: #{cross_modal_attention.1}
  #allocation0 [shape = 'u32[]', space=smem, size = 0x4, offset = 0x4, fixed_abs, tag = 'smem constant byte address 0x4 - core index']
  #allocation1 [shape = 'u32[144,128]{1,0:T(1,128)}', space=vmem, size = 0x12000, scoped, tag = 'internal scratch']
  %s0 = inlined_call_operand.vmem [shape: f32[12,32], index: 0, kind: input, shape index: {}]
  %s1 = inlined_call_operand.hbm [shape: f32[32,96], index: 1, kind: input, shape index: {}]
  %s2 = inlined_call_operand.vmem [shape: f32[1,96], index: 2, kind: input, shape index: {}]
  %s3 = inlined_call_operand.vmem [shape: f32[32,32], index: 3, kind: input, shape index: {}]
  %s4 = inlined_call_operand.hbm [shape: f32[3,32], index: 4, kind: input, shape index: {}]
  %s5 = inlined_call_operand.vmem [shape: f32[12,32], index: 5, kind: output, shape index: {}]
  %s6 = sld [smem:[#allocation0]]
  $region38: #{cross_modal_attention.1} parent=0
    _
  %s8 = ssub.s32 1, %s6
  %s9 = scalar_select 0, %s8, %s6
  $region1: #{cross_modal_attention.1} parent=0
    #allocation2 [shape = 'u8[16384]{0}', space=vmem, size = 0x4000, scoped, tag = 'input window, operand 1, single buffered']
    #allocation3 [shape = 's32[1]{0}', space=sflag, size = 0x4, scoped, tag = 'scoped memory for cross_modal_attention.1']
    #allocation4 [shape = 'u8[2048]{0}', space=vmem, size = 0x800, scoped, tag = 'input window, operand 4, single buffered']
    #allocation5 [shape = 's32[1]{0}', space=sflag, size = 0x4, scoped, tag = 'scoped memory for cross_modal_attention.1']
    %10 = vsyncpa [#allocation3], 0
    %11 = vsyncpa [#allocation5], 0
    // Predicated region
    $region2: #{cross_modal_attention.1} parent=1 // pred_check
      _
    $region3: #{cross_modal_attention.1} parent=1 // pred_check_branch
      %13 = sbr.rel (0) target = $region5
    $region4: #{cross_modal_attention.1} parent=1 // pred_region
      _
    $region5: #{cross_modal_attention.1} parent=1 // pred_fallthru
      _
    // Predicated region
    $region6: #{cross_modal_attention.1} parent=1 // pred_check
      _
    $region7: #{cross_modal_attention.1} parent=1 // pred_check_branch
      %15 = sbr.rel (0) target = $region9
    $region8: #{cross_modal_attention.1} parent=1 // pred_region
      %s17 = ssub.s32 512, 512
      %18 = vsyncadd [#allocation3], %s17
      %s19 = sshll.u32 [#allocation2], 4
      %s20 = int_to_ptr.vmem [resolvable:$true] %s19
      %25 = dma.hbm_to_vmem [thread:$0]  %s1, 512, %s20, [#allocation3], 128, 128, 8
    $region9: #{cross_modal_attention.1} parent=1 // pred_fallthru
      _
    // Predicated region
    $region10: #{cross_modal_attention.1} parent=1 // pred_check
      _
    $region11: #{cross_modal_attention.1} parent=1 // pred_check_branch
      %27 = sbr.rel (0) target = $region13
    $region12: #{cross_modal_attention.1} parent=1 // pred_region
      _
    $region13: #{cross_modal_attention.1} parent=1 // pred_fallthru
      _
    // Predicated region
    $region14: #{cross_modal_attention.1} parent=1 // pred_check
      _
    $region15: #{cross_modal_attention.1} parent=1 // pred_check_branch
      %29 = sbr.rel (0) target = $region17
    $region16: #{cross_modal_attention.1} parent=1 // pred_region
      _
    $region17: #{cross_modal_attention.1} parent=1 // pred_fallthru
      _
    // Predicated region
    $region18: #{cross_modal_attention.1} parent=1 // pred_check
      _
    $region19: #{cross_modal_attention.1} parent=1 // pred_check_branch
      %31 = sbr.rel (0) target = $region21
    $region20: #{cross_modal_attention.1} parent=1 // pred_region
      %s33 = ssub.s32 64, 64
      %34 = vsyncadd [#allocation5], %s33
      %s36 = sshll.u32 [#allocation4], 4
      %s37 = int_to_ptr.vmem [resolvable:$true] %s36
      %39 = dma.hbm_to_vmem [thread:$0]  %s4, 64, %s37, [#allocation5]
    $region21: #{cross_modal_attention.1} parent=1 // pred_fallthru
      _
    // Predicated region
    $region22: #{cross_modal_attention.1} parent=1 // pred_check
      _
    $region23: #{cross_modal_attention.1} parent=1 // pred_check_branch
      %41 = sbr.rel (0) target = $region25
    $region24: #{cross_modal_attention.1} parent=1 // pred_region
      %42 = dma.done [#allocation3], 512
    $region25: #{cross_modal_attention.1} parent=1 // pred_fallthru
      _
    // Predicated region
    $region26: #{cross_modal_attention.1} parent=1 // pred_check
      _
    $region27: #{cross_modal_attention.1} parent=1 // pred_check_branch
      %44 = sbr.rel (0) target = $region29
    $region28: #{cross_modal_attention.1} parent=1 // pred_region
      %45 = dma.done [#allocation5], 64
    $region29: #{cross_modal_attention.1} parent=1 // pred_fallthru
      _
    %v46 = vld [vmem:[%s0] sm:$0xff]
    %v47 = vld [vmem:[%s0 + $0x8] sm:$0xf]
    %v48 = vld [vmem:[#allocation2] sm:$0xff]
    %v49 = vld [vmem:[#allocation2 + $0x8] sm:$0xff]
    %v50 = vld [vmem:[#allocation2 + $0x10] sm:$0xff]
    %v51 = vld [vmem:[#allocation2 + $0x18] sm:$0xff]
    %v52 = vld [vmem:[%s2] sm:$0x1]
    %v54 = vlaneseq
    %v55 = vshrl.u32 %v54, 7
    %v56 = vsub.s32 0, %v55
    %v57 = vrot.slane %v52, %v56
    %vm59 = vcmask 261120
    %v61 = vsel %vm59, %v46, 0
    %v64 = vsel %vm59, %v47, 0
    %66 = vmatprep.subr.mxu0 0.0
    %67 = vmatpush1.msra.mxu0 0.0
    %68 = vmatprep.subr.mxu0 0.0
    %69 = vmatpush1.msra.mxu0 0.0
    %70 = vmatprep.subr.mxu0 0.0
    %71 = vmatpush1.msra.mxu0 0.0
    %72 = vmatprep.subr.mxu0 0.0
    %73 = vmatpush1.msra.mxu0 0.0
    %74 = vmatprep.subr.mxu0 0.0
    %75 = vmatpush1.msra.mxu0 0.0
    %76 = vmatprep.subr.mxu0 0.0
    %77 = vmatpush1.msra.mxu0 0.0
    %78 = vmatprep.subr.mxu0 0.0
    %79 = vmatpush1.msra.mxu0 0.0
    %80 = vmatprep.subr.mxu0 0.0
    %81 = vmatpush1.msra.mxu0 0.0
    %82 = vmatprep.subr.mxu0 0.0
    %83 = vmatpush1.msra.mxu0 0.0
    %84 = vmatprep.subr.mxu0 0.0
    %85 = vmatpush1.msra.mxu0 0.0
    %86 = vmatprep.subr.mxu0 0.0
    %87 = vmatpush1.msra.mxu0 0.0
    %88 = vmatprep.subr.mxu0 0.0
    %89 = vmatpush1.msra.mxu0 0.0
    %90 = vmatprep.subr.mxu0 0.0
    %91 = vmatpush1.msra.mxu0 %v51
    %92 = vmatprep.subr.mxu0 0.0
    %93 = vmatpush1.msra.mxu0 %v50
    %94 = vmatprep.subr.mxu0 0.0
    %95 = vmatpush1.msra.mxu0 %v49
    %96 = vmatprep.subr.mxu0 0.0
    %97 = vmatpush1.msra.mxu0 %v48
    %98 = vmatprep.subr.mxu0 0.0
    %99 = vmatpush2.msra.mxu0 0.0
    %100 = vmatprep.subr.mxu0 0.0
    %101 = vmatpush2.msra.mxu0 0.0
    %102 = vmatprep.subr.mxu0 0.0
    %103 = vmatpush2.msra.mxu0 0.0
    %104 = vmatprep.subr.mxu0 0.0
    %105 = vmatpush2.msra.mxu0 0.0
    %106 = vmatprep.subr.mxu0 0.0
    %107 = vmatpush2.msra.mxu0 0.0
    %108 = vmatprep.subr.mxu0 0.0
    %109 = vmatpush2.msra.mxu0 0.0
    %110 = vmatprep.subr.mxu0 0.0
    %111 = vmatpush2.msra.mxu0 0.0
    %112 = vmatprep.subr.mxu0 0.0
    %113 = vmatpush2.msra.mxu0 0.0
    %114 = vmatprep.subr.mxu0 0.0
    %115 = vmatpush2.msra.mxu0 0.0
    %116 = vmatprep.subr.mxu0 0.0
    %117 = vmatpush2.msra.mxu0 0.0
    %118 = vmatprep.subr.mxu0 0.0
    %119 = vmatpush2.msra.mxu0 0.0
    %120 = vmatprep.subr.mxu0 0.0
    %121 = vmatpush2.msra.mxu0 0.0
    %122 = vmatprep.subr.mxu0 0.0
    %123 = vmatpush2.msra.mxu0 0.0
    %124 = vmatprep.subr.mxu0 0.0
    %125 = vmatpush2.msra.mxu0 0.0
    %126 = vmatprep.subr.mxu0 0.0
    %127 = vmatpush2.msra.mxu0 0.0
    %128 = vmatprep.subr.mxu0 0.0
    %129 = vmatpush2.msra.mxu0 0.0
    %130 = vmatprep.mubr.f32.mxu0 0.0
    %131 = vmatmul.mubr.f32.gmra.mxu0 %v61
    %v132 = vpop.f32.mrf.mxu0
    %v133 = vadd.f32 %v57, %v132
    %v134 = vpop.f32.mrf.mxu0
    %135 = vmatprep.mubr.f32.mxu0 0.0
    %136 = vmatmul.mubr.f32.gmra.mxu0 %v64
    %v137 = vpop.f32.mrf.mxu0
    %v138 = vadd.f32 %v57, %v137
    %v139 = vpop.f32.mrf.mxu0
    %140 = vdwg.mxu0
    %v141 = vlaneseq
    %v142 = vshrl.u32 %v141, 7
    %v143 = vadd.s32 %v142, 8
    %v144 = vlaneseq
    %v145 = vand.u32 %v144, 127
    %vm146 = vcmp.lt.s32.totalorder %v142, 0
    %v147 = vsub.s32 0, %v142
    %v148 = vsel %vm146, %v147, %v142
    %v149 = vshrl.u32 %v148, 1
    %v150 = vand.u32 %v148, 1
    %v151 = vsub.s32 0, %v150
    %v152 = vsel %vm146, %v151, %v150
    %vm153 = vcmp.lt.s32.totalorder %v143, 0
    %v154 = vsub.s32 0, %v143
    %v155 = vsel %vm153, %v154, %v143
    %v156 = vshrl.u32 %v155, 1
    %v157 = vand.u32 %v155, 1
    %v158 = vsub.s32 0, %v157
    %v159 = vsel %vm153, %v158, %v157
    %vm160 = vcmp.ne.s32.totalorder %v152, 0
    %vm161 = vcmp.ne.s32.totalorder %v159, 0
    %vm162 = vcmp.lt.s32.totalorder %v152, 0
    %vm163 = vcmp.lt.s32.totalorder %v159, 0
    %vm164 = vmand %vm162, %vm160
    %vm165 = vmand %vm163, %vm161
    %v166 = vadd.s32 %v152, 2
    %v167 = vadd.s32 %v159, 2
    %v168 = vsel %vm164, %v166, %v152
    %v169 = vsel %vm165, %v167, %v159
    %vm170 = vcmp.lt.s32.totalorder %v145, 0
    %v171 = vsub.s32 0, %v145
    %v172 = vsel %vm170, %v171, %v145
    %v173 = vshrl.u32 %v172, 1
    %v174 = vand.u32 %v172, 1
    %v175 = vsub.s32 0, %v174
    %v176 = vsel %vm170, %v175, %v174
    %vm177 = vcmp.ne.s32.totalorder %v176, 0
    %vm178 = vcmp.lt.s32.totalorder %v176, 0
    %vm179 = vmand %vm178, %vm177
    %v180 = vadd.s32 %v176, 2
    %v181 = vsel %vm179, %v180, %v176
    %vm182 = vcmp.eq.s32.totalorder %v168, %v181
    %vm183 = vcmp.eq.s32.totalorder %v169, %v181
    %v184 = vsel %vm182, 0.0, -1e+30
    %v185 = vsel %vm183, 0.0, -1e+30
    %188 = vrot.lane.b32.xlu0 %v133, 96
    %v189 = vpop.permute.xlu0 %188
    %190 = vrot.lane.b32.xlu0 %v138, 96
    %v191 = vpop.permute.xlu0 %190
    %vm192 = vcmask 64512
    %v193 = vsel %vm192, %v133, 0
    %v195 = vsel %vm192, %v138, 0
    %v197 = vsel %vm192, %v189, 0
    %v199 = vsel %vm192, %v191, 0
    %201 = vmatprep.subr.mxu0 0.0
    %202 = vmatpush1.xpose.msra.mxu0 0.0
    %203 = vmatprep.subr.mxu0 0.0
    %204 = vmatpush1.xpose.msra.mxu0 0.0
    %205 = vmatprep.subr.mxu0 0.0
    %206 = vmatpush1.xpose.msra.mxu0 0.0
    %207 = vmatprep.subr.mxu0 0.0
    %208 = vmatpush1.xpose.msra.mxu0 0.0
    %209 = vmatprep.subr.mxu0 0.0
    %210 = vmatpush1.xpose.msra.mxu0 0.0
    %211 = vmatprep.subr.mxu0 0.0
    %212 = vmatpush1.xpose.msra.mxu0 0.0
    %213 = vmatprep.subr.mxu0 0.0
    %214 = vmatpush1.xpose.msra.mxu0 0.0
    %215 = vmatprep.subr.mxu0 0.0
    %216 = vmatpush1.xpose.msra.mxu0 0.0
    %217 = vmatprep.subr.mxu0 0.0
    %218 = vmatpush1.xpose.msra.mxu0 0.0
    %219 = vmatprep.subr.mxu0 0.0
    %220 = vmatpush1.xpose.msra.mxu0 0.0
    %221 = vmatprep.subr.mxu0 0.0
    %222 = vmatpush1.xpose.msra.mxu0 0.0
    %223 = vmatprep.subr.mxu0 0.0
    %224 = vmatpush1.xpose.msra.mxu0 0.0
    %225 = vmatprep.subr.mxu0 0.0
    %226 = vmatpush1.xpose.msra.mxu0 0.0
    %227 = vmatprep.subr.mxu0 0.0
    %228 = vmatpush1.xpose.msra.mxu0 0.0
    %229 = vmatprep.subr.mxu0 0.0
    %230 = vmatpush1.xpose.msra.mxu0 %v199
    %231 = vmatprep.subr.mxu0 0.0
    %232 = vmatpush1.xpose.msra.mxu0 %v197
    %233 = vmatprep.subr.mxu0 0.0
    %234 = vmatpush2.xpose.msra.mxu0 0.0
    %235 = vmatprep.subr.mxu0 0.0
    %236 = vmatpush2.xpose.msra.mxu0 0.0
    %237 = vmatprep.subr.mxu0 0.0
    %238 = vmatpush2.xpose.msra.mxu0 0.0
    %239 = vmatprep.subr.mxu0 0.0
    %240 = vmatpush2.xpose.msra.mxu0 0.0
    %241 = vmatprep.subr.mxu0 0.0
    %242 = vmatpush2.xpose.msra.mxu0 0.0
    %243 = vmatprep.subr.mxu0 0.0
    %244 = vmatpush2.xpose.msra.mxu0 0.0
    %245 = vmatprep.subr.mxu0 0.0
    %246 = vmatpush2.xpose.msra.mxu0 0.0
    %247 = vmatprep.subr.mxu0 0.0
    %248 = vmatpush2.xpose.msra.mxu0 0.0
    %249 = vmatprep.subr.mxu0 0.0
    %250 = vmatpush2.xpose.msra.mxu0 0.0
    %251 = vmatprep.subr.mxu0 0.0
    %252 = vmatpush2.xpose.msra.mxu0 0.0
    %253 = vmatprep.subr.mxu0 0.0
    %254 = vmatpush2.xpose.msra.mxu0 0.0
    %255 = vmatprep.subr.mxu0 0.0
    %256 = vmatpush2.xpose.msra.mxu0 0.0
    %257 = vmatprep.subr.mxu0 0.0
    %258 = vmatpush2.xpose.msra.mxu0 0.0
    %259 = vmatprep.subr.mxu0 0.0
    %260 = vmatpush2.xpose.msra.mxu0 0.0
    %261 = vmatprep.subr.mxu0 0.0
    %262 = vmatpush2.xpose.msra.mxu0 0.0
    %263 = vmatprep.subr.mxu0 0.0
    %264 = vmatpush2.xpose.msra.mxu0 0.0
    %265 = vmatprep.mubr.f32.mxu0 0.0
    %266 = vmatmul.mubr.f32.gmra.mxu0 %v193
    %v267 = vpop.f32.mrf.mxu0
    %v268 = vadd.f32 %v184, %v267
    %v269 = vpop.f32.mrf.mxu0
    %270 = vmatprep.mubr.f32.mxu0 0.0
    %271 = vmatmul.mubr.f32.gmra.mxu0 %v195
    %v272 = vpop.f32.mrf.mxu0
    %v273 = vadd.f32 %v185, %v272
    %v274 = vpop.f32.mrf.mxu0
    %275 = vdwg.mxu0
    %vm276 = vcmask 97280
    %v277 = vsel %vm276, %v268, -inf
    %278 = vmax.xlane.f32.xlu0 %v277
    %v279 = vpop.xlane.xlu0 %278
    %vm280 = vcmask 93184
    %v281 = vsel %vm280, %v273, -inf
    %282 = vmax.xlane.f32.xlu0 %v281
    %v283 = vpop.xlane.xlu0 %282
    %v284 = vsub.f32 %v268, %v279
    %v285 = vsub.f32 %v273, %v283
    %v286 = vmul.f32 %v284, 1.442695
    %v287 = vpow.pop %v286
    %v288 = vmul.f32 %v285, 1.442695
    %v289 = vpow.pop %v288
    %v290 = vsel %vm276, %v287, 0.0
    %291 = vadd.xlane.f32.xlu0 %v290
    %v292 = vpop.xlane.xlu0 %291
    %v293 = vsel %vm280, %v289, 0.0
    %294 = vadd.xlane.f32.xlu0 %v293
    %v295 = vpop.xlane.xlu0 %294
    %v296 = vrcp.pop %v292
    %v297 = vrcp.pop %v295
    %v298 = vmul.f32 %v287, %v296
    %v299 = vmul.f32 %v289, %v297
    %300 = vrot.lane.b32.xlu0 %v133, 64
    %v301 = vpop.permute.xlu0 %300
    %302 = vrot.lane.b32.xlu0 %v138, 64
    %v303 = vpop.permute.xlu0 %302
    %v306 = vsel %vm276, %v298, 0
    %v309 = vsel %vm276, %v299, 0
    %vm311 = vcmask 1043456
    %v312 = vsel %vm311, %v303, 0
    %314 = vmatprep.subr.mxu0 0.0
    %315 = vmatpush1.msra.mxu0 0.0
    %316 = vmatprep.subr.mxu0 0.0
    %317 = vmatpush1.msra.mxu0 0.0
    %318 = vmatprep.subr.mxu0 0.0
    %319 = vmatpush1.msra.mxu0 0.0
    %320 = vmatprep.subr.mxu0 0.0
    %321 = vmatpush1.msra.mxu0 0.0
    %322 = vmatprep.subr.mxu0 0.0
    %323 = vmatpush1.msra.mxu0 0.0
    %324 = vmatprep.subr.mxu0 0.0
    %325 = vmatpush1.msra.mxu0 0.0
    %326 = vmatprep.subr.mxu0 0.0
    %327 = vmatpush1.msra.mxu0 0.0
    %328 = vmatprep.subr.mxu0 0.0
    %329 = vmatpush1.msra.mxu0 0.0
    %330 = vmatprep.subr.mxu0 0.0
    %331 = vmatpush1.msra.mxu0 0.0
    %332 = vmatprep.subr.mxu0 0.0
    %333 = vmatpush1.msra.mxu0 0.0
    %334 = vmatprep.subr.mxu0 0.0
    %335 = vmatpush1.msra.mxu0 0.0
    %336 = vmatprep.subr.mxu0 0.0
    %337 = vmatpush1.msra.mxu0 0.0
    %338 = vmatprep.subr.mxu0 0.0
    %339 = vmatpush1.msra.mxu0 0.0
    %340 = vmatprep.subr.mxu0 0.0
    %341 = vmatpush1.msra.mxu0 0.0
    %342 = vmatprep.subr.mxu0 0.0
    %343 = vmatpush1.msra.mxu0 %v312
    %344 = vmatprep.subr.mxu0 0.0
    %345 = vmatpush1.msra.mxu0 %v301
    %346 = vmatprep.subr.mxu0 0.0
    %347 = vmatpush2.msra.mxu0 0.0
    %348 = vmatprep.subr.mxu0 0.0
    %349 = vmatpush2.msra.mxu0 0.0
    %350 = vmatprep.subr.mxu0 0.0
    %351 = vmatpush2.msra.mxu0 0.0
    %352 = vmatprep.subr.mxu0 0.0
    %353 = vmatpush2.msra.mxu0 0.0
    %354 = vmatprep.subr.mxu0 0.0
    %355 = vmatpush2.msra.mxu0 0.0
    %356 = vmatprep.subr.mxu0 0.0
    %357 = vmatpush2.msra.mxu0 0.0
    %358 = vmatprep.subr.mxu0 0.0
    %359 = vmatpush2.msra.mxu0 0.0
    %360 = vmatprep.subr.mxu0 0.0
    %361 = vmatpush2.msra.mxu0 0.0
    %362 = vmatprep.subr.mxu0 0.0
    %363 = vmatpush2.msra.mxu0 0.0
    %364 = vmatprep.subr.mxu0 0.0
    %365 = vmatpush2.msra.mxu0 0.0
    %366 = vmatprep.subr.mxu0 0.0
    %367 = vmatpush2.msra.mxu0 0.0
    %368 = vmatprep.subr.mxu0 0.0
    %369 = vmatpush2.msra.mxu0 0.0
    %370 = vmatprep.subr.mxu0 0.0
    %371 = vmatpush2.msra.mxu0 0.0
    %372 = vmatprep.subr.mxu0 0.0
    %373 = vmatpush2.msra.mxu0 0.0
    %374 = vmatprep.subr.mxu0 0.0
    %375 = vmatpush2.msra.mxu0 0.0
    %376 = vmatprep.subr.mxu0 0.0
    %377 = vmatpush2.msra.mxu0 0.0
    %378 = vmatprep.mubr.f32.mxu0 0.0
    %379 = vmatmul.mubr.f32.gmra.mxu0 %v306
    %v380 = vpop.f32.mrf.mxu0
    %v381 = vadd.f32 0.0, %v380
    %v382 = vpop.f32.mrf.mxu0
    %383 = vmatprep.mubr.f32.mxu0 0.0
    %384 = vmatmul.mubr.f32.gmra.mxu0 %v309
    %v385 = vpop.f32.mrf.mxu0
    %v386 = vadd.f32 0.0, %v385
    %v387 = vpop.f32.mrf.mxu0
    %388 = vdwg.mxu0
    %389 = vrot.lane.b32.xlu0 %v133, 120
    %v390 = vpop.permute.xlu0 %389
    %391 = vrot.lane.b32.xlu0 %v138, 120
    %v392 = vpop.permute.xlu0 %391
    %393 = vrot.lane.b32.xlu0 %v133, 88
    %v394 = vpop.permute.xlu0 %393
    %395 = vrot.lane.b32.xlu0 %v138, 88
    %v396 = vpop.permute.xlu0 %395
    %v397 = vsel %vm192, %v390, 0
    %v399 = vsel %vm192, %v392, 0
    %v401 = vsel %vm192, %v394, 0
    %v403 = vsel %vm192, %v396, 0
    %405 = vmatprep.subr.mxu0 0.0
    %406 = vmatpush1.xpose.msra.mxu0 0.0
    %407 = vmatprep.subr.mxu0 0.0
    %408 = vmatpush1.xpose.msra.mxu0 0.0
    %409 = vmatprep.subr.mxu0 0.0
    %410 = vmatpush1.xpose.msra.mxu0 0.0
    %411 = vmatprep.subr.mxu0 0.0
    %412 = vmatpush1.xpose.msra.mxu0 0.0
    %413 = vmatprep.subr.mxu0 0.0
    %414 = vmatpush1.xpose.msra.mxu0 0.0
    %415 = vmatprep.subr.mxu0 0.0
    %416 = vmatpush1.xpose.msra.mxu0 0.0
    %417 = vmatprep.subr.mxu0 0.0
    %418 = vmatpush1.xpose.msra.mxu0 0.0
    %419 = vmatprep.subr.mxu0 0.0
    %420 = vmatpush1.xpose.msra.mxu0 0.0
    %421 = vmatprep.subr.mxu0 0.0
    %422 = vmatpush1.xpose.msra.mxu0 0.0
    %423 = vmatprep.subr.mxu0 0.0
    %424 = vmatpush1.xpose.msra.mxu0 0.0
    %425 = vmatprep.subr.mxu0 0.0
    %426 = vmatpush1.xpose.msra.mxu0 0.0
    %427 = vmatprep.subr.mxu0 0.0
    %428 = vmatpush1.xpose.msra.mxu0 0.0
    %429 = vmatprep.subr.mxu0 0.0
    %430 = vmatpush1.xpose.msra.mxu0 0.0
    %431 = vmatprep.subr.mxu0 0.0
    %432 = vmatpush1.xpose.msra.mxu0 0.0
    %433 = vmatprep.subr.mxu0 0.0
    %434 = vmatpush1.xpose.msra.mxu0 %v403
    %435 = vmatprep.subr.mxu0 0.0
    %436 = vmatpush1.xpose.msra.mxu0 %v401
    %437 = vmatprep.subr.mxu0 0.0
    %438 = vmatpush2.xpose.msra.mxu0 0.0
    %439 = vmatprep.subr.mxu0 0.0
    %440 = vmatpush2.xpose.msra.mxu0 0.0
    %441 = vmatprep.subr.mxu0 0.0
    %442 = vmatpush2.xpose.msra.mxu0 0.0
    %443 = vmatprep.subr.mxu0 0.0
    %444 = vmatpush2.xpose.msra.mxu0 0.0
    %445 = vmatprep.subr.mxu0 0.0
    %446 = vmatpush2.xpose.msra.mxu0 0.0
    %447 = vmatprep.subr.mxu0 0.0
    %448 = vmatpush2.xpose.msra.mxu0 0.0
    %449 = vmatprep.subr.mxu0 0.0
    %450 = vmatpush2.xpose.msra.mxu0 0.0
    %451 = vmatprep.subr.mxu0 0.0
    %452 = vmatpush2.xpose.msra.mxu0 0.0
    %453 = vmatprep.subr.mxu0 0.0
    %454 = vmatpush2.xpose.msra.mxu0 0.0
    %455 = vmatprep.subr.mxu0 0.0
    %456 = vmatpush2.xpose.msra.mxu0 0.0
    %457 = vmatprep.subr.mxu0 0.0
    %458 = vmatpush2.xpose.msra.mxu0 0.0
    %459 = vmatprep.subr.mxu0 0.0
    %460 = vmatpush2.xpose.msra.mxu0 0.0
    %461 = vmatprep.subr.mxu0 0.0
    %462 = vmatpush2.xpose.msra.mxu0 0.0
    %463 = vmatprep.subr.mxu0 0.0
    %464 = vmatpush2.xpose.msra.mxu0 0.0
    %465 = vmatprep.subr.mxu0 0.0
    %466 = vmatpush2.xpose.msra.mxu0 0.0
    %467 = vmatprep.subr.mxu0 0.0
    %468 = vmatpush2.xpose.msra.mxu0 0.0
    %469 = vmatprep.mubr.f32.mxu0 0.0
    %470 = vmatmul.mubr.f32.gmra.mxu0 %v397
    %v471 = vpop.f32.mrf.mxu0
    %v472 = vadd.f32 %v184, %v471
    %v473 = vpop.f32.mrf.mxu0
    %474 = vmatprep.mubr.f32.mxu0 0.0
    %475 = vmatmul.mubr.f32.gmra.mxu0 %v399
    %v476 = vpop.f32.mrf.mxu0
    %v477 = vadd.f32 %v185, %v476
    %v478 = vpop.f32.mrf.mxu0
    %479 = vdwg.mxu0
    %v480 = vsel %vm276, %v472, -inf
    %481 = vmax.xlane.f32.xlu0 %v480
    %v482 = vpop.xlane.xlu0 %481
    %v483 = vsel %vm280, %v477, -inf
    %484 = vmax.xlane.f32.xlu0 %v483
    %v485 = vpop.xlane.xlu0 %484
    %v486 = vsub.f32 %v472, %v482
    %v487 = vsub.f32 %v477, %v485
    %v488 = vmul.f32 %v486, 1.442695
    %v489 = vpow.pop %v488
    %v490 = vmul.f32 %v487, 1.442695
    %v491 = vpow.pop %v490
    %v492 = vsel %vm276, %v489, 0.0
    %493 = vadd.xlane.f32.xlu0 %v492
    %v494 = vpop.xlane.xlu0 %493
    %v495 = vsel %vm280, %v491, 0.0
    %496 = vadd.xlane.f32.xlu0 %v495
    %v497 = vpop.xlane.xlu0 %496
    %v498 = vrcp.pop %v494
    %v499 = vrcp.pop %v497
    %v500 = vmul.f32 %v489, %v498
    %v501 = vmul.f32 %v491, %v499
    %502 = vrot.lane.b32.xlu0 %v133, 56
    %v503 = vpop.permute.xlu0 %502
    %504 = vrot.lane.b32.xlu0 %v138, 56
    %v505 = vpop.permute.xlu0 %504
    %v508 = vsel %vm276, %v500, 0
    %v511 = vsel %vm276, %v501, 0
    %v513 = vsel %vm311, %v505, 0
    %515 = vmatprep.subr.mxu0 0.0
    %516 = vmatpush1.msra.mxu0 0.0
    %517 = vmatprep.subr.mxu0 0.0
    %518 = vmatpush1.msra.mxu0 0.0
    %519 = vmatprep.subr.mxu0 0.0
    %520 = vmatpush1.msra.mxu0 0.0
    %521 = vmatprep.subr.mxu0 0.0
    %522 = vmatpush1.msra.mxu0 0.0
    %523 = vmatprep.subr.mxu0 0.0
    %524 = vmatpush1.msra.mxu0 0.0
    %525 = vmatprep.subr.mxu0 0.0
    %526 = vmatpush1.msra.mxu0 0.0
    %527 = vmatprep.subr.mxu0 0.0
    %528 = vmatpush1.msra.mxu0 0.0
    %529 = vmatprep.subr.mxu0 0.0
    %530 = vmatpush1.msra.mxu0 0.0
    %531 = vmatprep.subr.mxu0 0.0
    %532 = vmatpush1.msra.mxu0 0.0
    %533 = vmatprep.subr.mxu0 0.0
    %534 = vmatpush1.msra.mxu0 0.0
    %535 = vmatprep.subr.mxu0 0.0
    %536 = vmatpush1.msra.mxu0 0.0
    %537 = vmatprep.subr.mxu0 0.0
    %538 = vmatpush1.msra.mxu0 0.0
    %539 = vmatprep.subr.mxu0 0.0
    %540 = vmatpush1.msra.mxu0 0.0
    %541 = vmatprep.subr.mxu0 0.0
    %542 = vmatpush1.msra.mxu0 0.0
    %543 = vmatprep.subr.mxu0 0.0
    %544 = vmatpush1.msra.mxu0 %v513
    %545 = vmatprep.subr.mxu0 0.0
    %546 = vmatpush1.msra.mxu0 %v503
    %547 = vmatprep.subr.mxu0 0.0
    %548 = vmatpush2.msra.mxu0 0.0
    %549 = vmatprep.subr.mxu0 0.0
    %550 = vmatpush2.msra.mxu0 0.0
    %551 = vmatprep.subr.mxu0 0.0
    %552 = vmatpush2.msra.mxu0 0.0
    %553 = vmatprep.subr.mxu0 0.0
    %554 = vmatpush2.msra.mxu0 0.0
    %555 = vmatprep.subr.mxu0 0.0
    %556 = vmatpush2.msra.mxu0 0.0
    %557 = vmatprep.subr.mxu0 0.0
    %558 = vmatpush2.msra.mxu0 0.0
    %559 = vmatprep.subr.mxu0 0.0
    %560 = vmatpush2.msra.mxu0 0.0
    %561 = vmatprep.subr.mxu0 0.0
    %562 = vmatpush2.msra.mxu0 0.0
    %563 = vmatprep.subr.mxu0 0.0
    %564 = vmatpush2.msra.mxu0 0.0
    %565 = vmatprep.subr.mxu0 0.0
    %566 = vmatpush2.msra.mxu0 0.0
    %567 = vmatprep.subr.mxu0 0.0
    %568 = vmatpush2.msra.mxu0 0.0
    %569 = vmatprep.subr.mxu0 0.0
    %570 = vmatpush2.msra.mxu0 0.0
    %571 = vmatprep.subr.mxu0 0.0
    %572 = vmatpush2.msra.mxu0 0.0
    %573 = vmatprep.subr.mxu0 0.0
    %574 = vmatpush2.msra.mxu0 0.0
    %575 = vmatprep.subr.mxu0 0.0
    %576 = vmatpush2.msra.mxu0 0.0
    %577 = vmatprep.subr.mxu0 0.0
    %578 = vmatpush2.msra.mxu0 0.0
    %579 = vmatprep.mubr.f32.mxu0 0.0
    %580 = vmatmul.mubr.f32.gmra.mxu0 %v508
    %v581 = vpop.f32.mrf.mxu0
    %v582 = vadd.f32 0.0, %v581
    %v583 = vpop.f32.mrf.mxu0
    %584 = vmatprep.mubr.f32.mxu0 0.0
    %585 = vmatmul.mubr.f32.gmra.mxu0 %v511
    %v586 = vpop.f32.mrf.mxu0
    %v587 = vadd.f32 0.0, %v586
    %v588 = vpop.f32.mrf.mxu0
    %589 = vdwg.mxu0
    %590 = vrot.lane.b32.xlu0 %v133, 112
    %v591 = vpop.permute.xlu0 %590
    %592 = vrot.lane.b32.xlu0 %v138, 112
    %v593 = vpop.permute.xlu0 %592
    %594 = vrot.lane.b32.xlu0 %v133, 80
    %v595 = vpop.permute.xlu0 %594
    %596 = vrot.lane.b32.xlu0 %v138, 80
    %v597 = vpop.permute.xlu0 %596
    %v598 = vsel %vm192, %v591, 0
    %v600 = vsel %vm192, %v593, 0
    %v602 = vsel %vm192, %v595, 0
    %v604 = vsel %vm192, %v597, 0
    %606 = vmatprep.subr.mxu0 0.0
    %607 = vmatpush1.xpose.msra.mxu0 0.0
    %608 = vmatprep.subr.mxu0 0.0
    %609 = vmatpush1.xpose.msra.mxu0 0.0
    %610 = vmatprep.subr.mxu0 0.0
    %611 = vmatpush1.xpose.msra.mxu0 0.0
    %612 = vmatprep.subr.mxu0 0.0
    %613 = vmatpush1.xpose.msra.mxu0 0.0
    %614 = vmatprep.subr.mxu0 0.0
    %615 = vmatpush1.xpose.msra.mxu0 0.0
    %616 = vmatprep.subr.mxu0 0.0
    %617 = vmatpush1.xpose.msra.mxu0 0.0
    %618 = vmatprep.subr.mxu0 0.0
    %619 = vmatpush1.xpose.msra.mxu0 0.0
    %620 = vmatprep.subr.mxu0 0.0
    %621 = vmatpush1.xpose.msra.mxu0 0.0
    %622 = vmatprep.subr.mxu0 0.0
    %623 = vmatpush1.xpose.msra.mxu0 0.0
    %624 = vmatprep.subr.mxu0 0.0
    %625 = vmatpush1.xpose.msra.mxu0 0.0
    %626 = vmatprep.subr.mxu0 0.0
    %627 = vmatpush1.xpose.msra.mxu0 0.0
    %628 = vmatprep.subr.mxu0 0.0
    %629 = vmatpush1.xpose.msra.mxu0 0.0
    %630 = vmatprep.subr.mxu0 0.0
    %631 = vmatpush1.xpose.msra.mxu0 0.0
    %632 = vmatprep.subr.mxu0 0.0
    %633 = vmatpush1.xpose.msra.mxu0 0.0
    %634 = vmatprep.subr.mxu0 0.0
    %635 = vmatpush1.xpose.msra.mxu0 %v604
    %636 = vmatprep.subr.mxu0 0.0
    %637 = vmatpush1.xpose.msra.mxu0 %v602
    %638 = vmatprep.subr.mxu0 0.0
    %639 = vmatpush2.xpose.msra.mxu0 0.0
    %640 = vmatprep.subr.mxu0 0.0
    %641 = vmatpush2.xpose.msra.mxu0 0.0
    %642 = vmatprep.subr.mxu0 0.0
    %643 = vmatpush2.xpose.msra.mxu0 0.0
    %644 = vmatprep.subr.mxu0 0.0
    %645 = vmatpush2.xpose.msra.mxu0 0.0
    %646 = vmatprep.subr.mxu0 0.0
    %647 = vmatpush2.xpose.msra.mxu0 0.0
    %648 = vmatprep.subr.mxu0 0.0
    %649 = vmatpush2.xpose.msra.mxu0 0.0
    %650 = vmatprep.subr.mxu0 0.0
    %651 = vmatpush2.xpose.msra.mxu0 0.0
    %652 = vmatprep.subr.mxu0 0.0
    %653 = vmatpush2.xpose.msra.mxu0 0.0
    %654 = vmatprep.subr.mxu0 0.0
    %655 = vmatpush2.xpose.msra.mxu0 0.0
    %656 = vmatprep.subr.mxu0 0.0
    %657 = vmatpush2.xpose.msra.mxu0 0.0
    %658 = vmatprep.subr.mxu0 0.0
    %659 = vmatpush2.xpose.msra.mxu0 0.0
    %660 = vmatprep.subr.mxu0 0.0
    %661 = vmatpush2.xpose.msra.mxu0 0.0
    %662 = vmatprep.subr.mxu0 0.0
    %663 = vmatpush2.xpose.msra.mxu0 0.0
    %664 = vmatprep.subr.mxu0 0.0
    %665 = vmatpush2.xpose.msra.mxu0 0.0
    %666 = vmatprep.subr.mxu0 0.0
    %667 = vmatpush2.xpose.msra.mxu0 0.0
    %668 = vmatprep.subr.mxu0 0.0
    %669 = vmatpush2.xpose.msra.mxu0 0.0
    %670 = vmatprep.mubr.f32.mxu0 0.0
    %671 = vmatmul.mubr.f32.gmra.mxu0 %v598
    %v672 = vpop.f32.mrf.mxu0
    %v673 = vadd.f32 %v184, %v672
    %v674 = vpop.f32.mrf.mxu0
    %675 = vmatprep.mubr.f32.mxu0 0.0
    %676 = vmatmul.mubr.f32.gmra.mxu0 %v600
    %v677 = vpop.f32.mrf.mxu0
    %v678 = vadd.f32 %v185, %v677
    %v679 = vpop.f32.mrf.mxu0
    %680 = vdwg.mxu0
    %v681 = vsel %vm276, %v673, -inf
    %682 = vmax.xlane.f32.xlu0 %v681
    %v683 = vpop.xlane.xlu0 %682
    %v684 = vsel %vm280, %v678, -inf
    %685 = vmax.xlane.f32.xlu0 %v684
    %v686 = vpop.xlane.xlu0 %685
    %v687 = vsub.f32 %v673, %v683
    %v688 = vsub.f32 %v678, %v686
    %v689 = vmul.f32 %v687, 1.442695
    %v690 = vpow.pop %v689
    %v691 = vmul.f32 %v688, 1.442695
    %v692 = vpow.pop %v691
    %v693 = vsel %vm276, %v690, 0.0
    %694 = vadd.xlane.f32.xlu0 %v693
    %v695 = vpop.xlane.xlu0 %694
    %v696 = vsel %vm280, %v692, 0.0
    %697 = vadd.xlane.f32.xlu0 %v696
    %v698 = vpop.xlane.xlu0 %697
    %v699 = vrcp.pop %v695
    %v700 = vrcp.pop %v698
    %v701 = vmul.f32 %v690, %v699
    %v702 = vmul.f32 %v692, %v700
    %703 = vrot.lane.b32.xlu0 %v133, 48
    %v704 = vpop.permute.xlu0 %703
    %705 = vrot.lane.b32.xlu0 %v138, 48
    %v706 = vpop.permute.xlu0 %705
    %v709 = vsel %vm276, %v701, 0
    %v712 = vsel %vm276, %v702, 0
    %v714 = vsel %vm311, %v706, 0
    %716 = vmatprep.subr.mxu0 0.0
    %717 = vmatpush1.msra.mxu0 0.0
    %718 = vmatprep.subr.mxu0 0.0
    %719 = vmatpush1.msra.mxu0 0.0
    %720 = vmatprep.subr.mxu0 0.0
    %721 = vmatpush1.msra.mxu0 0.0
    %722 = vmatprep.subr.mxu0 0.0
    %723 = vmatpush1.msra.mxu0 0.0
    %724 = vmatprep.subr.mxu0 0.0
    %725 = vmatpush1.msra.mxu0 0.0
    %726 = vmatprep.subr.mxu0 0.0
    %727 = vmatpush1.msra.mxu0 0.0
    %728 = vmatprep.subr.mxu0 0.0
    %729 = vmatpush1.msra.mxu0 0.0
    %730 = vmatprep.subr.mxu0 0.0
    %731 = vmatpush1.msra.mxu0 0.0
    %732 = vmatprep.subr.mxu0 0.0
    %733 = vmatpush1.msra.mxu0 0.0
    %734 = vmatprep.subr.mxu0 0.0
    %735 = vmatpush1.msra.mxu0 0.0
    %736 = vmatprep.subr.mxu0 0.0
    %737 = vmatpush1.msra.mxu0 0.0
    %738 = vmatprep.subr.mxu0 0.0
    %739 = vmatpush1.msra.mxu0 0.0
    %740 = vmatprep.subr.mxu0 0.0
    %741 = vmatpush1.msra.mxu0 0.0
    %742 = vmatprep.subr.mxu0 0.0
    %743 = vmatpush1.msra.mxu0 0.0
    %744 = vmatprep.subr.mxu0 0.0
    %745 = vmatpush1.msra.mxu0 %v714
    %746 = vmatprep.subr.mxu0 0.0
    %747 = vmatpush1.msra.mxu0 %v704
    %748 = vmatprep.subr.mxu0 0.0
    %749 = vmatpush2.msra.mxu0 0.0
    %750 = vmatprep.subr.mxu0 0.0
    %751 = vmatpush2.msra.mxu0 0.0
    %752 = vmatprep.subr.mxu0 0.0
    %753 = vmatpush2.msra.mxu0 0.0
    %754 = vmatprep.subr.mxu0 0.0
    %755 = vmatpush2.msra.mxu0 0.0
    %756 = vmatprep.subr.mxu0 0.0
    %757 = vmatpush2.msra.mxu0 0.0
    %758 = vmatprep.subr.mxu0 0.0
    %759 = vmatpush2.msra.mxu0 0.0
    %760 = vmatprep.subr.mxu0 0.0
    %761 = vmatpush2.msra.mxu0 0.0
    %762 = vmatprep.subr.mxu0 0.0
    %763 = vmatpush2.msra.mxu0 0.0
    %764 = vmatprep.subr.mxu0 0.0
    %765 = vmatpush2.msra.mxu0 0.0
    %766 = vmatprep.subr.mxu0 0.0
    %767 = vmatpush2.msra.mxu0 0.0
    %768 = vmatprep.subr.mxu0 0.0
    %769 = vmatpush2.msra.mxu0 0.0
    %770 = vmatprep.subr.mxu0 0.0
    %771 = vmatpush2.msra.mxu0 0.0
    %772 = vmatprep.subr.mxu0 0.0
    %773 = vmatpush2.msra.mxu0 0.0
    %774 = vmatprep.subr.mxu0 0.0
    %775 = vmatpush2.msra.mxu0 0.0
    %776 = vmatprep.subr.mxu0 0.0
    %777 = vmatpush2.msra.mxu0 0.0
    %778 = vmatprep.subr.mxu0 0.0
    %779 = vmatpush2.msra.mxu0 0.0
    %780 = vmatprep.mubr.f32.mxu0 0.0
    %781 = vmatmul.mubr.f32.gmra.mxu0 %v709
    %v782 = vpop.f32.mrf.mxu0
    %v783 = vadd.f32 0.0, %v782
    %v784 = vpop.f32.mrf.mxu0
    %785 = vmatprep.mubr.f32.mxu0 0.0
    %786 = vmatmul.mubr.f32.gmra.mxu0 %v712
    %v787 = vpop.f32.mrf.mxu0
    %v788 = vadd.f32 0.0, %v787
    %v789 = vpop.f32.mrf.mxu0
    %790 = vdwg.mxu0
    %791 = vrot.lane.b32.xlu0 %v133, 104
    %v792 = vpop.permute.xlu0 %791
    %793 = vrot.lane.b32.xlu0 %v138, 104
    %v794 = vpop.permute.xlu0 %793
    %795 = vrot.lane.b32.xlu0 %v133, 72
    %v796 = vpop.permute.xlu0 %795
    %797 = vrot.lane.b32.xlu0 %v138, 72
    %v798 = vpop.permute.xlu0 %797
    %v799 = vsel %vm192, %v792, 0
    %v801 = vsel %vm192, %v794, 0
    %v803 = vsel %vm192, %v796, 0
    %v805 = vsel %vm192, %v798, 0
    %807 = vmatprep.subr.mxu0 0.0
    %808 = vmatpush1.xpose.msra.mxu0 0.0
    %809 = vmatprep.subr.mxu0 0.0
    %810 = vmatpush1.xpose.msra.mxu0 0.0
    %811 = vmatprep.subr.mxu0 0.0
    %812 = vmatpush1.xpose.msra.mxu0 0.0
    %813 = vmatprep.subr.mxu0 0.0
    %814 = vmatpush1.xpose.msra.mxu0 0.0
    %815 = vmatprep.subr.mxu0 0.0
    %816 = vmatpush1.xpose.msra.mxu0 0.0
    %817 = vmatprep.subr.mxu0 0.0
    %818 = vmatpush1.xpose.msra.mxu0 0.0
    %819 = vmatprep.subr.mxu0 0.0
    %820 = vmatpush1.xpose.msra.mxu0 0.0
    %821 = vmatprep.subr.mxu0 0.0
    %822 = vmatpush1.xpose.msra.mxu0 0.0
    %823 = vmatprep.subr.mxu0 0.0
    %824 = vmatpush1.xpose.msra.mxu0 0.0
    %825 = vmatprep.subr.mxu0 0.0
    %826 = vmatpush1.xpose.msra.mxu0 0.0
    %827 = vmatprep.subr.mxu0 0.0
    %828 = vmatpush1.xpose.msra.mxu0 0.0
    %829 = vmatprep.subr.mxu0 0.0
    %830 = vmatpush1.xpose.msra.mxu0 0.0
    %831 = vmatprep.subr.mxu0 0.0
    %832 = vmatpush1.xpose.msra.mxu0 0.0
    %833 = vmatprep.subr.mxu0 0.0
    %834 = vmatpush1.xpose.msra.mxu0 0.0
    %835 = vmatprep.subr.mxu0 0.0
    %836 = vmatpush1.xpose.msra.mxu0 %v805
    %837 = vmatprep.subr.mxu0 0.0
    %838 = vmatpush1.xpose.msra.mxu0 %v803
    %839 = vmatprep.subr.mxu0 0.0
    %840 = vmatpush2.xpose.msra.mxu0 0.0
    %841 = vmatprep.subr.mxu0 0.0
    %842 = vmatpush2.xpose.msra.mxu0 0.0
    %843 = vmatprep.subr.mxu0 0.0
    %844 = vmatpush2.xpose.msra.mxu0 0.0
    %845 = vmatprep.subr.mxu0 0.0
    %846 = vmatpush2.xpose.msra.mxu0 0.0
    %847 = vmatprep.subr.mxu0 0.0
    %848 = vmatpush2.xpose.msra.mxu0 0.0
    %849 = vmatprep.subr.mxu0 0.0
    %850 = vmatpush2.xpose.msra.mxu0 0.0
    %851 = vmatprep.subr.mxu0 0.0
    %852 = vmatpush2.xpose.msra.mxu0 0.0
    %853 = vmatprep.subr.mxu0 0.0
    %854 = vmatpush2.xpose.msra.mxu0 0.0
    %855 = vmatprep.subr.mxu0 0.0
    %856 = vmatpush2.xpose.msra.mxu0 0.0
    %857 = vmatprep.subr.mxu0 0.0
    %858 = vmatpush2.xpose.msra.mxu0 0.0
    %859 = vmatprep.subr.mxu0 0.0
    %860 = vmatpush2.xpose.msra.mxu0 0.0
    %861 = vmatprep.subr.mxu0 0.0
    %862 = vmatpush2.xpose.msra.mxu0 0.0
    %863 = vmatprep.subr.mxu0 0.0
    %864 = vmatpush2.xpose.msra.mxu0 0.0
    %865 = vmatprep.subr.mxu0 0.0
    %866 = vmatpush2.xpose.msra.mxu0 0.0
    %867 = vmatprep.subr.mxu0 0.0
    %868 = vmatpush2.xpose.msra.mxu0 0.0
    %869 = vmatprep.subr.mxu0 0.0
    %870 = vmatpush2.xpose.msra.mxu0 0.0
    %871 = vmatprep.mubr.f32.mxu0 0.0
    %872 = vmatmul.mubr.f32.gmra.mxu0 %v799
    %v873 = vpop.f32.mrf.mxu0
    %v874 = vadd.f32 %v184, %v873
    %v875 = vpop.f32.mrf.mxu0
    %876 = vmatprep.mubr.f32.mxu0 0.0
    %877 = vmatmul.mubr.f32.gmra.mxu0 %v801
    %v878 = vpop.f32.mrf.mxu0
    %v879 = vadd.f32 %v185, %v878
    %v880 = vpop.f32.mrf.mxu0
    %881 = vdwg.mxu0
    %v882 = vsel %vm276, %v874, -inf
    %883 = vmax.xlane.f32.xlu0 %v882
    %v884 = vpop.xlane.xlu0 %883
    %v885 = vsel %vm280, %v879, -inf
    %886 = vmax.xlane.f32.xlu0 %v885
    %v887 = vpop.xlane.xlu0 %886
    %v888 = vsub.f32 %v874, %v884
    %v889 = vsub.f32 %v879, %v887
    %v890 = vmul.f32 %v888, 1.442695
    %v891 = vpow.pop %v890
    %v892 = vmul.f32 %v889, 1.442695
    %v893 = vpow.pop %v892
    %v894 = vsel %vm276, %v891, 0.0
    %895 = vadd.xlane.f32.xlu0 %v894
    %v896 = vpop.xlane.xlu0 %895
    %v897 = vsel %vm280, %v893, 0.0
    %898 = vadd.xlane.f32.xlu0 %v897
    %v899 = vpop.xlane.xlu0 %898
    %v900 = vrcp.pop %v896
    %v901 = vrcp.pop %v899
    %v902 = vmul.f32 %v891, %v900
    %v903 = vmul.f32 %v893, %v901
    %904 = vrot.lane.b32.xlu0 %v133, 40
    %v905 = vpop.permute.xlu0 %904
    %906 = vrot.lane.b32.xlu0 %v138, 40
    %v907 = vpop.permute.xlu0 %906
    %v910 = vsel %vm276, %v902, 0
    %v913 = vsel %vm276, %v903, 0
    %v915 = vsel %vm311, %v907, 0
    %917 = vmatprep.subr.mxu0 0.0
    %918 = vmatpush1.msra.mxu0 0.0
    %919 = vmatprep.subr.mxu0 0.0
    %920 = vmatpush1.msra.mxu0 0.0
    %921 = vmatprep.subr.mxu0 0.0
    %922 = vmatpush1.msra.mxu0 0.0
    %923 = vmatprep.subr.mxu0 0.0
    %924 = vmatpush1.msra.mxu0 0.0
    %925 = vmatprep.subr.mxu0 0.0
    %926 = vmatpush1.msra.mxu0 0.0
    %927 = vmatprep.subr.mxu0 0.0
    %928 = vmatpush1.msra.mxu0 0.0
    %929 = vmatprep.subr.mxu0 0.0
    %930 = vmatpush1.msra.mxu0 0.0
    %931 = vmatprep.subr.mxu0 0.0
    %932 = vmatpush1.msra.mxu0 0.0
    %933 = vmatprep.subr.mxu0 0.0
    %934 = vmatpush1.msra.mxu0 0.0
    %935 = vmatprep.subr.mxu0 0.0
    %936 = vmatpush1.msra.mxu0 0.0
    %937 = vmatprep.subr.mxu0 0.0
    %938 = vmatpush1.msra.mxu0 0.0
    %939 = vmatprep.subr.mxu0 0.0
    %940 = vmatpush1.msra.mxu0 0.0
    %941 = vmatprep.subr.mxu0 0.0
    %942 = vmatpush1.msra.mxu0 0.0
    %943 = vmatprep.subr.mxu0 0.0
    %944 = vmatpush1.msra.mxu0 0.0
    %945 = vmatprep.subr.mxu0 0.0
    %946 = vmatpush1.msra.mxu0 %v915
    %947 = vmatprep.subr.mxu0 0.0
    %948 = vmatpush1.msra.mxu0 %v905
    %949 = vmatprep.subr.mxu0 0.0
    %950 = vmatpush2.msra.mxu0 0.0
    %951 = vmatprep.subr.mxu0 0.0
    %952 = vmatpush2.msra.mxu0 0.0
    %953 = vmatprep.subr.mxu0 0.0
    %954 = vmatpush2.msra.mxu0 0.0
    %955 = vmatprep.subr.mxu0 0.0
    %956 = vmatpush2.msra.mxu0 0.0
    %957 = vmatprep.subr.mxu0 0.0
    %958 = vmatpush2.msra.mxu0 0.0
    %959 = vmatprep.subr.mxu0 0.0
    %960 = vmatpush2.msra.mxu0 0.0
    %961 = vmatprep.subr.mxu0 0.0
    %962 = vmatpush2.msra.mxu0 0.0
    %963 = vmatprep.subr.mxu0 0.0
    %964 = vmatpush2.msra.mxu0 0.0
    %965 = vmatprep.subr.mxu0 0.0
    %966 = vmatpush2.msra.mxu0 0.0
    %967 = vmatprep.subr.mxu0 0.0
    %968 = vmatpush2.msra.mxu0 0.0
    %969 = vmatprep.subr.mxu0 0.0
    %970 = vmatpush2.msra.mxu0 0.0
    %971 = vmatprep.subr.mxu0 0.0
    %972 = vmatpush2.msra.mxu0 0.0
    %973 = vmatprep.subr.mxu0 0.0
    %974 = vmatpush2.msra.mxu0 0.0
    %975 = vmatprep.subr.mxu0 0.0
    %976 = vmatpush2.msra.mxu0 0.0
    %977 = vmatprep.subr.mxu0 0.0
    %978 = vmatpush2.msra.mxu0 0.0
    %979 = vmatprep.subr.mxu0 0.0
    %980 = vmatpush2.msra.mxu0 0.0
    %981 = vmatprep.mubr.f32.mxu0 0.0
    %982 = vmatmul.mubr.f32.gmra.mxu0 %v910
    %v983 = vpop.f32.mrf.mxu0
    %v984 = vadd.f32 0.0, %v983
    %v985 = vpop.f32.mrf.mxu0
    %986 = vmatprep.mubr.f32.mxu0 0.0
    %987 = vmatmul.mubr.f32.gmra.mxu0 %v913
    %v988 = vpop.f32.mrf.mxu0
    %v989 = vadd.f32 0.0, %v988
    %v990 = vpop.f32.mrf.mxu0
    %991 = vdwg.mxu0
    %994 = vrot.lane.b32.xlu0 %v582, 8
    %v995 = vpop.permute.xlu0 %994
    %996 = vrot.lane.b32.xlu0 %v587, 8
    %v997 = vpop.permute.xlu0 %996
    %1002 = vrot.lane.b32.xlu0 %v783, 16
    %v1003 = vpop.permute.xlu0 %1002
    %1004 = vrot.lane.b32.xlu0 %v788, 16
    %v1005 = vpop.permute.xlu0 %1004
    %1010 = vrot.lane.b32.xlu0 %v984, 24
    %v1011 = vpop.permute.xlu0 %1010
    %1012 = vrot.lane.b32.xlu0 %v989, 24
    %v1013 = vpop.permute.xlu0 %1012
    %v1016 = vsel %vm192, %v381, %v995
    %v1017 = vsel %vm192, %v386, %v997
    %vm1018 = vcmask 130048
    %v1019 = vsel %vm1018, %v1016, %v1003
    %v1020 = vsel %vm1018, %v1017, %v1005
    %vm1021 = vcmask 195584
    %v1022 = vsel %vm1021, %v1019, %v1011
    %v1023 = vsel %vm1021, %v1020, %v1013
    %v1024 = vld [vmem:[%s3] sm:$0xff]
    %v1025 = vld [vmem:[%s3 + $0x8] sm:$0xff]
    %v1026 = vld [vmem:[%s3 + $0x10] sm:$0xff]
    %v1027 = vld [vmem:[%s3 + $0x18] sm:$0xff]
    %v1028 = vld [vmem:[#allocation4 + $0x2] sm:$0x1]
    %v1029 = vlaneseq
    %v1030 = vshrl.u32 %v1029, 7
    %v1031 = vsub.s32 0, %v1030
    %v1032 = vrot.slane %v1028, %v1031
    %v1034 = vsel %vm59, %v1022, 0
    %v1037 = vsel %vm59, %v1023, 0
    %1039 = vmatprep.subr.mxu0 0.0
    %1040 = vmatpush1.msra.mxu0 0.0
    %1041 = vmatprep.subr.mxu0 0.0
    %1042 = vmatpush1.msra.mxu0 0.0
    %1043 = vmatprep.subr.mxu0 0.0
    %1044 = vmatpush1.msra.mxu0 0.0
    %1045 = vmatprep.subr.mxu0 0.0
    %1046 = vmatpush1.msra.mxu0 0.0
    %1047 = vmatprep.subr.mxu0 0.0
    %1048 = vmatpush1.msra.mxu0 0.0
    %1049 = vmatprep.subr.mxu0 0.0
    %1050 = vmatpush1.msra.mxu0 0.0
    %1051 = vmatprep.subr.mxu0 0.0
    %1052 = vmatpush1.msra.mxu0 0.0
    %1053 = vmatprep.subr.mxu0 0.0
    %1054 = vmatpush1.msra.mxu0 0.0
    %1055 = vmatprep.subr.mxu0 0.0
    %1056 = vmatpush1.msra.mxu0 0.0
    %1057 = vmatprep.subr.mxu0 0.0
    %1058 = vmatpush1.msra.mxu0 0.0
    %1059 = vmatprep.subr.mxu0 0.0
    %1060 = vmatpush1.msra.mxu0 0.0
    %1061 = vmatprep.subr.mxu0 0.0
    %1062 = vmatpush1.msra.mxu0 0.0
    %1063 = vmatprep.subr.mxu0 0.0
    %1064 = vmatpush1.msra.mxu0 %v1027
    %1065 = vmatprep.subr.mxu0 0.0
    %1066 = vmatpush1.msra.mxu0 %v1026
    %1067 = vmatprep.subr.mxu0 0.0
    %1068 = vmatpush1.msra.mxu0 %v1025
    %1069 = vmatprep.subr.mxu0 0.0
    %1070 = vmatpush1.msra.mxu0 %v1024
    %1071 = vmatprep.subr.mxu0 0.0
    %1072 = vmatpush2.msra.mxu0 0.0
    %1073 = vmatprep.subr.mxu0 0.0
    %1074 = vmatpush2.msra.mxu0 0.0
    %1075 = vmatprep.subr.mxu0 0.0
    %1076 = vmatpush2.msra.mxu0 0.0
    %1077 = vmatprep.subr.mxu0 0.0
    %1078 = vmatpush2.msra.mxu0 0.0
    %1079 = vmatprep.subr.mxu0 0.0
    %1080 = vmatpush2.msra.mxu0 0.0
    %1081 = vmatprep.subr.mxu0 0.0
    %1082 = vmatpush2.msra.mxu0 0.0
    %1083 = vmatprep.subr.mxu0 0.0
    %1084 = vmatpush2.msra.mxu0 0.0
    %1085 = vmatprep.subr.mxu0 0.0
    %1086 = vmatpush2.msra.mxu0 0.0
    %1087 = vmatprep.subr.mxu0 0.0
    %1088 = vmatpush2.msra.mxu0 0.0
    %1089 = vmatprep.subr.mxu0 0.0
    %1090 = vmatpush2.msra.mxu0 0.0
    %1091 = vmatprep.subr.mxu0 0.0
    %1092 = vmatpush2.msra.mxu0 0.0
    %1093 = vmatprep.subr.mxu0 0.0
    %1094 = vmatpush2.msra.mxu0 0.0
    %1095 = vmatprep.subr.mxu0 0.0
    %1096 = vmatpush2.msra.mxu0 0.0
    %1097 = vmatprep.subr.mxu0 0.0
    %1098 = vmatpush2.msra.mxu0 0.0
    %1099 = vmatprep.subr.mxu0 0.0
    %1100 = vmatpush2.msra.mxu0 0.0
    %1101 = vmatprep.subr.mxu0 0.0
    %1102 = vmatpush2.msra.mxu0 0.0
    %1103 = vmatprep.mubr.f32.mxu0 0.0
    %1104 = vmatmul.mubr.f32.gmra.mxu0 %v1034
    %v1105 = vpop.f32.mrf.mxu0
    %v1106 = vadd.f32 %v1032, %v1105
    %v1107 = vpop.f32.mrf.mxu0
    %1108 = vmatprep.mubr.f32.mxu0 0.0
    %1109 = vmatmul.mubr.f32.gmra.mxu0 %v1037
    %v1110 = vpop.f32.mrf.mxu0
    %v1111 = vadd.f32 %v1032, %v1110
    %v1112 = vpop.f32.mrf.mxu0
    %1113 = vdwg.mxu0
    %v1114 = vadd.f32 %v46, %v1106
    %v1115 = vadd.f32 %v47, %v1111
    %v1116 = vsel %vm59, %v1114, 0.0
    %1117 = vadd.xlane.f32.xlu0 %v1116
    %v1118 = vpop.xlane.xlu0 %1117
    %vm1119 = vcmask 257024
    %v1120 = vsel %vm1119, %v1115, 0.0
    %1121 = vadd.xlane.f32.xlu0 %v1120
    %v1122 = vpop.xlane.xlu0 %1121
    %v1123 = vrcp.pop 32.0
    %v1124 = vmul.f32 %v1118, %v1123
    %v1125 = vmul.f32 %v1122, %v1123
    %v1126 = vsub.f32 %v1114, %v1124
    %v1127 = vsub.f32 %v1115, %v1125
    %v1128 = vmul.f32 %v1126, %v1126
    %v1129 = vmul.f32 %v1127, %v1127
    %v1130 = vsel %vm59, %v1128, 0.0
    %1131 = vadd.xlane.f32.xlu0 %v1130
    %v1132 = vpop.xlane.xlu0 %1131
    %v1133 = vsel %vm1119, %v1129, 0.0
    %1134 = vadd.xlane.f32.xlu0 %v1133
    %v1135 = vpop.xlane.xlu0 %1134
    %v1136 = vmul.f32 %v1132, %v1123
    %v1137 = vmul.f32 %v1135, %v1123
    %v1138 = vadd.f32 %v1136, 1e-05
    %v1139 = vadd.f32 %v1137, 1e-05
    %v1140 = vrsqrt.pop %v1138
    %v1141 = vrsqrt.pop %v1139
    %v1142 = vmul.f32 %v1126, %v1140
    %v1143 = vmul.f32 %v1127, %v1141
    %v1144 = vld [vmem:[#allocation4] sm:$0x1]
    %v1145 = vlaneseq
    %v1146 = vshrl.u32 %v1145, 7
    %v1147 = vsub.s32 0, %v1146
    %v1148 = vrot.slane %v1144, %v1147
    %v1149 = vmul.f32 %v1142, %v1148
    %v1150 = vmul.f32 %v1143, %v1148
    %v1151 = vld [vmem:[#allocation4 + $0x1] sm:$0x1]
    %v1152 = vlaneseq
    %v1153 = vshrl.u32 %v1152, 7
    %v1154 = vsub.s32 0, %v1153
    %v1155 = vrot.slane %v1151, %v1154
    %v1156 = vadd.f32 %v1149, %v1155
    %v1157 = vadd.f32 %v1150, %v1155
    %1158 = vst.msk [vmem:[%s5] sm:$0xff] %vm59, %v1156
    %1159 = vst.msk [vmem:[%s5 + $0x8] sm:$0xf] %vm1119, %v1157
    // Predicated region
    $region30: #{cross_modal_attention.1} parent=1 // pred_check
      _
    $region31: #{cross_modal_attention.1} parent=1 // pred_check_branch
      %1161 = sbr.rel (0) target = $region33
    $region32: #{cross_modal_attention.1} parent=1 // pred_region
      _
    $region33: #{cross_modal_attention.1} parent=1 // pred_fallthru
      _
    // Predicated region
    $region34: #{cross_modal_attention.1} parent=1 // pred_check
      _
    $region35: #{cross_modal_attention.1} parent=1 // pred_check_branch
      %1163 = sbr.rel (0) target = $region37
    $region36: #{cross_modal_attention.1} parent=1 // pred_region
      _
    $region37: #{cross_modal_attention.1} parent=1 // pred_fallthru
      _
    %1164 = vsyncpa [#allocation3], 1
    %1165 = vsyncpa [#allocation5], 1

</llo_original>
